<compile_context>
chip_gen: v5e
topology: v5e:2x2
jax: 0.10.0
libtpu: 0.0.40
codegen_flags: <defaults>
</compile_context>

<pallas_src>
import math
import jax
import jax.numpy as jnp
from jax.experimental import pallas as pl
from jax.experimental.pallas import tpu as pltpu


def _round_up(a: int, b: int) -> int:
    return ((a + b - 1) // b) * b


def _cdiv(a: int, b: int) -> int:
    return (a + b - 1) // b


# --------------------------------------------------------------------------
# Kernels: plain tiled matmul with an f32 VMEM accumulator over the K axis.
# The pruning mask has already been folded into the weight in the wrapper.
# --------------------------------------------------------------------------
def _mm_bias_kernel(x_ref, wt_ref, b_ref, o_ref, acc_ref):
    """x_ref (tm,tk) @ wt_ref (tk,tn) -> acc (tm,tn); bias added at k==last."""
    k = pl.program_id(2)

    @pl.when(k == 0)
    def _init():
        acc_ref[...] = jnp.zeros_like(acc_ref)

    acc_ref[...] += jnp.dot(x_ref[...], wt_ref[...],
                            preferred_element_type=jnp.float32)

    @pl.when(k == pl.num_programs(2) - 1)
    def _store():
        o_ref[...] = (acc_ref[...] + b_ref[...]).astype(o_ref.dtype)


def _mm_nobias_kernel(x_ref, wt_ref, o_ref, acc_ref):
    k = pl.program_id(2)

    @pl.when(k == 0)
    def _init():
        acc_ref[...] = jnp.zeros_like(acc_ref)

    acc_ref[...] += jnp.dot(x_ref[...], wt_ref[...],
                            preferred_element_type=jnp.float32)

    @pl.when(k == pl.num_programs(2) - 1)
    def _store():
        o_ref[...] = acc_ref[...].astype(o_ref.dtype)


# --------------------------------------------------------------------------
# Per-generation tile table: (tm, tn, tk, vmem_limit_bytes, two_tensorcores)
#   v5e : 128 MiB VMEM but ~0.82 TB/s HBM and a 16 MiB default scoped limit.
#   v6e : 128 MiB VMEM, ~1.4 TB/s HBM -> biggest tiles.
#   v7x : only 64 MiB VMEM, 3.2 TB/s HBM, 2 TensorCores -> tighter budget.
# --------------------------------------------------------------------------
_TILE_TABLE = {
    "v5e":     (512,  512,  1024, 64 << 20, False),
    "v6e":     (1024, 1024, 1024, 64 << 20, False),
    "v7x":     (1024, 1024, 1024, 48 << 20, True),
    "unknown": (512,  512,  1024, 48 << 20, False),
}


def _tpu_generation() -> str:
    try:
        kind = jax.devices()[0].device_kind.lower()
    except Exception:  # no devices / non-TPU backend
        return "unknown"
    if "v7" in kind:
        return "v7x"
    if "v6" in kind:
        return "v6e"
    if "v5e" in kind or "v5 lite" in kind or "v5lite" in kind:
        return "v5e"
    return "unknown"


def masked_linear_prepacked(x, wt, bias=None, *, compute_dtype=None,
                            tile_m=None, tile_n=None, tile_k=None):
    """y = x @ wt + bias, wt already pre-masked and in (in_features, out_features)
    layout.  Use this entry point when parameters are stored pre-packed so the
    (weight*mask).T HBM round trip is not paid on every forward call."""
    *lead, K = x.shape
    Kw, N = wt.shape
    assert Kw == K, (wt.shape, K)

    M = 1
    for d in lead:
        M *= d

    out_dtype = x.dtype
    cdt = jnp.dtype(compute_dtype) if compute_dtype is not None else jnp.dtype(x.dtype)

    # Stream x and the pre-masked weight in one common compute dtype (bf16
    # halves HBM bytes in this bandwidth-bound kernel; accumulation stays f32).
    x2d = x.reshape(M, K).astype(cdt)
    wt = wt.astype(cdt)

    gen = _tpu_generation()
    dtm, dtn, dtk, vmem_limit, two_tc = _TILE_TABLE[gen]
    tile_m = int(tile_m) if tile_m else dtm
    tile_n = int(tile_n) if tile_n else dtn
    tile_k = int(tile_k) if tile_k else dtk

    # Full-extent blocks for small dims (legal even when not (8,128)-aligned),
    # otherwise the per-generation MXU-friendly tiles.  bf16 packs 16 rows per
    # sublane group, so round small-M tiles to 16 in that case.
    sublane = 16 if cdt == jnp.bfloat16 else 8
    tm = tile_m if M > tile_m else _round_up(max(M, 1), sublane)
    tn = tile_n if N > tile_n else N
    tk = tile_k if K > tile_k else K

    # v7x has 2 TensorCores: if the i (M) axis collapses to one block, make
    # sure the j (N) "parallel" axis has >= 2 blocks so both cores get work.
    if two_tc and _cdiv(M, tm) < 2 and N > 256:
        half_n = _round_up(_cdiv(N, 2), 256)
        if half_n < tn:
            tn = half_n

    M_p = _round_up(M, tm)
    N_p = _round_up(N, tn)
    K_p = _round_up(K, tk)

    # Pad only when needed (zero-padded K contributes nothing; padded M/N rows
    # and cols are sliced off below).
    if M_p != M or K_p != K:
        x2d = jnp.pad(x2d, ((0, M_p - M), (0, K_p - K)))
    if K_p != K or N_p != N:
        wt = jnp.pad(wt, ((0, K_p - K), (0, N_p - N)))

    grid = (M_p // tm, N_p // tn, K_p // tk)

    in_specs = [
        pl.BlockSpec((tm, tk), lambda i, j, k: (i, k)),   # x tile
        pl.BlockSpec((tk, tn), lambda i, j, k: (k, j)),   # (weight*mask)^T tile
    ]
    operands = [x2d, wt]

    if bias is not None:
        bias_row = bias.astype(jnp.float32).reshape(1, N)
        if N_p != N:
            bias_row = jnp.pad(bias_row, ((0, 0), (0, N_p - N)))
        in_specs.append(pl.BlockSpec((1, tn), lambda i, j, k: (0, j)))
        operands.append(bias_row)
        kernel = _mm_bias_kernel
    else:
        kernel = _mm_nobias_kernel   # no synthetic zero-bias stream

    out = pl.pallas_call(
        kernel,
        out_shape=jax.ShapeDtypeStruct((M_p, N_p), out_dtype),
        grid_spec=pltpu.PrefetchScalarGridSpec(
            num_scalar_prefetch=0,
            grid=grid,
            in_specs=in_specs,
            out_specs=pl.BlockSpec((tm, tn), lambda i, j, k: (i, j)),
            scratch_shapes=[pltpu.VMEM((tm, tn), jnp.float32)],
        ),
        compiler_params=pltpu.CompilerParams(
            dimension_semantics=("parallel", "parallel", "arbitrary"),
            vmem_limit_bytes=vmem_limit,
        ),
    )(*operands)

    out = out[:M, :N]
    return out.reshape(*lead, N)


def pack_masked_weight(weight, mask):
    """One-time parameter prep: pre-masked weight in (in_features, out_features)
    layout.  Store / freeze this to avoid re-doing the mask+transpose per call."""
    return (weight * mask).T


def masked_linear(x, weight, mask, bias=None, *, compute_dtype=None,
                  tile_m=None, tile_n=None, tile_k=None):
    """y = x @ (weight * mask).T + bias for x of shape (..., in_features).

    weight, mask: (out_features, in_features) as in the PyTorch module.
    The mask multiply is fused into the transpose by XLA and done exactly once
    per call; the Pallas kernel itself only sees the pre-masked (K, N) weight.
    """
    N, K = weight.shape
    assert mask.shape == (N, K), (mask.shape, (N, K))
    wt = pack_masked_weight(weight, mask)          # (K, N), mask already applied
    return masked_linear_prepacked(x, wt, bias, compute_dtype=compute_dtype,
                                   tile_m=tile_m, tile_n=tile_n, tile_k=tile_k)


def init_masked_linear_params(key, in_features, out_features, dtype=jnp.float32):
    """Deterministic init mirroring MaskedLinear.reset_parameters()."""
    kw, kb = jax.random.split(key)
    # kaiming_uniform_(weight, a=sqrt(5)) with fan_in = in_features.
    gain = math.sqrt(2.0 / (1.0 + 5.0))
    w_bound = gain * math.sqrt(3.0 / in_features)
    weight = jax.random.uniform(
        kw, (out_features, in_features), dtype, minval=-w_bound, maxval=w_bound)
    mask = jnp.ones((out_features, in_features), dtype)   # no pruning yet
    b_bound = 1.0 / math.sqrt(in_features)
    bias = jax.random.uniform(
        kb, (out_features,), dtype, minval=-b_bound, maxval=b_bound)
    return weight, mask, bias


# TODO(synk): prune / prune_filters / mask_on_input_channels are host-side
# parameter mutations (no forward compute); out of scope for the forward kernel.

if __name__ == "__main__":
    key = jax.random.PRNGKey(0)
    k_x, k_p, k_m, k_x2, k_w2, k_m2, k_b2, k_x3, k_w3, k_m3 = jax.random.split(key, 10)

    fn = jax.jit(masked_linear,
                 static_argnames=("compute_dtype", "tile_m", "tile_n", "tile_k"))

    # 1) Small MaskedLinear-shaped check (batch=2, seq=8, in=32, out=64), f32.
    batch, seq, in_features, out_features = 2, 8, 32, 64
    x = jax.random.normal(k_x, (batch, seq, in_features), jnp.float32)
    weight, mask, bias = init_masked_linear_params(k_p, in_features, out_features)
    mask = (jax.random.uniform(k_m, mask.shape) > 0.3).astype(jnp.float32)

    y = jax.block_until_ready(fn(x, weight, mask, bias))
    y_ref = jnp.einsum("bsk,nk->bsn", x, weight * mask) + bias
    assert y.shape == (batch, seq, out_features)
    assert jnp.allclose(y, y_ref, atol=1e-5, rtol=1e-5), "mismatch vs reference"

    # 2) Shape exercising the M/N/K tiling, padding and the K-reduction
    #    accumulator path (explicit small tiles -> grid = (3, 3, 3)).
    #    Integer-valued inputs keep kernel and reference exact in f32.
    M2, K2, N2 = 384, 640, 320
    xb = jax.random.randint(k_x2, (M2, K2), -3, 4).astype(jnp.float32)
    wb = jax.random.randint(k_w2, (N2, K2), -3, 4).astype(jnp.float32)
    mb = (jax.random.uniform(k_m2, (N2, K2)) > 0.3).astype(jnp.float32)
    bb = jax.random.randint(k_b2, (N2,), -3, 4).astype(jnp.float32)

    yb = jax.block_until_ready(fn(xb, wb, mb, bb, tile_m=128, tile_n=128, tile_k=256))
    yb_ref = xb @ (wb * mb).T + bb
    assert yb.shape == (M2, N2)
    assert jnp.allclose(yb, yb_ref, atol=1e-4, rtol=1e-4), "mismatch (tiled path)"

    # 3) bias=None specialization + bf16 streaming path (small integer values
    #    are exact in bf16; accumulation is f32, so result matches exactly).
    M3, K3, N3 = 16, 32, 64
    xc = jax.random.randint(k_x3, (M3, K3), -3, 4).astype(jnp.float32)
    wc = jax.random.randint(k_w3, (N3, K3), -3, 4).astype(jnp.float32)
    mc = (jax.random.uniform(k_m3, (N3, K3)) > 0.5).astype(jnp.float32)

    yc = jax.block_until_ready(fn(xc, wc, mc, None, compute_dtype=jnp.bfloat16))
    yc_ref = xc @ (wc * mc).T
    assert yc.shape == (M3, N3)
    assert jnp.allclose(yc, yc_ref, atol=1e-4, rtol=1e-4), "mismatch (bf16/no-bias)"

    print("KERNEL_OK")
</pallas_src>

<mosaic_0001>
module attributes {stable_mosaic.version = 11 : i64} {
  func.func @_mm_bias_kernel(%arg0: i32, %arg1: i32, %arg2: i32, %arg3: memref<16x32xf32, #tpu.memory_space<vmem>>, %arg4: memref<32x64xf32, #tpu.memory_space<vmem>>, %arg5: memref<1x64xf32, #tpu.memory_space<vmem>>, %arg6: memref<16x64xf32, #tpu.memory_space<vmem>>, %arg7: memref<16x64xf32, #tpu.memory_space<vmem>>) attributes {dimension_semantics = [#tpu.dimension_semantics<parallel>, #tpu.dimension_semantics<parallel>, #tpu.dimension_semantics<arbitrary>], iteration_bounds = array<i64: 1, 1, 1>, scalar_prefetch = 0 : i64, scratch_operands = 1 : i64, tpu.core_type = #tpu.core_type<tc>, window_params = [{transform_indices = @transform_0, window_bounds = array<i64: 16, 32>}, {transform_indices = @transform_1, window_bounds = array<i64: 32, 64>}, {transform_indices = @transform_2, window_bounds = array<i64: 1, 64>}, {transform_indices = @transform_3, window_bounds = array<i64: 16, 64>}]} {
    %c0_i32 = arith.constant 0 : i32
    %0 = arith.cmpi eq, %arg2, %c0_i32 : i32
    %1 = arith.extui %0 : i1 to i32
    %c0_i32_0 = arith.constant 0 : i32
    %2 = arith.cmpi ne, %1, %c0_i32_0 : i32
    scf.if %2 {
      %cst_10 = arith.constant 0.000000e+00 : f32
      %12 = vector.broadcast %cst_10 : f32 to vector<16x64xf32>
      %c0_11 = arith.constant 0 : index
      %c0_12 = arith.constant 0 : index
      %13 = vector.load %arg7[%c0_11, %c0_12] : memref<16x64xf32, #tpu.memory_space<vmem>>, vector<16x64xf32>
      tpu.vector_store %arg7[%c0_11, %c0_12], %12 {strides = array<i32>} : memref<16x64xf32, #tpu.memory_space<vmem>>, vector<16x64xf32>,
    } else {
    }
    %c0 = arith.constant 0 : index
    %c0_1 = arith.constant 0 : index
    %3 = vector.load %arg7[%c0, %c0_1] : memref<16x64xf32, #tpu.memory_space<vmem>>, vector<16x64xf32>
    %c0_2 = arith.constant 0 : index
    %c0_3 = arith.constant 0 : index
    %4 = vector.load %arg3[%c0_2, %c0_3] : memref<16x32xf32, #tpu.memory_space<vmem>>, vector<16x32xf32>
    %c0_4 = arith.constant 0 : index
    %c0_5 = arith.constant 0 : index
    %5 = vector.load %arg4[%c0_4, %c0_5] : memref<32x64xf32, #tpu.memory_space<vmem>>, vector<32x64xf32>
    %cst = arith.constant dense<0.000000e+00> : vector<16x64xf32>
    %6 = tpu.matmul %4, %5, %cst {dimension_numbers = #tpu.dot_dimension_numbers<[1], [0], [0], [1], [0, 0, 1, 1], [], []>} : vector<16x32xf32>, vector<32x64xf32>, vector<16x64xf32> -> vector<16x64xf32>
    %7 = arith.addf %3, %6 : vector<16x64xf32>
    %c0_6 = arith.constant 0 : index
    %c0_7 = arith.constant 0 : index
    %8 = vector.load %arg7[%c0_6, %c0_7] : memref<16x64xf32, #tpu.memory_space<vmem>>, vector<16x64xf32>
    tpu.vector_store %arg7[%c0_6, %c0_7], %7 {strides = array<i32>} : memref<16x64xf32, #tpu.memory_space<vmem>>, vector<16x64xf32>,
    %c0_i32_8 = arith.constant 0 : i32
    %9 = arith.cmpi eq, %arg2, %c0_i32_8 : i32
    %10 = arith.extui %9 : i1 to i32
    %c0_i32_9 = arith.constant 0 : i32
    %11 = arith.cmpi ne, %10, %c0_i32_9 : i32
    scf.if %11 {
      %c0_10 = arith.constant 0 : index
      %c0_11 = arith.constant 0 : index
      %12 = vector.load %arg7[%c0_10, %c0_11] : memref<16x64xf32, #tpu.memory_space<vmem>>, vector<16x64xf32>
      %c0_12 = arith.constant 0 : index
      %c0_13 = arith.constant 0 : index
      %13 = vector.load %arg5[%c0_12, %c0_13] : memref<1x64xf32, #tpu.memory_space<vmem>>, vector<1x64xf32>
      %14 = vector.broadcast %13 : vector<1x64xf32> to vector<16x64xf32>
      %15 = arith.addf %12, %14 : vector<16x64xf32>
      %c0_14 = arith.constant 0 : index
      %c0_15 = arith.constant 0 : index
      %16 = vector.load %arg6[%c0_14, %c0_15] : memref<16x64xf32, #tpu.memory_space<vmem>>, vector<16x64xf32>
      tpu.vector_store %arg6[%c0_14, %c0_15], %15 {strides = array<i32>} : memref<16x64xf32, #tpu.memory_space<vmem>>, vector<16x64xf32>,
    } else {
    }
    return
  }
  func.func @transform_0(%arg0: i32, %arg1: i32, %arg2: i32) -> (i32, i32) {
    %c0_i32 = arith.constant 0 : i32
    return %arg0, %arg2 : i32, i32
  }
  func.func @transform_1(%arg0: i32, %arg1: i32, %arg2: i32) -> (i32, i32) {
    %c0_i32 = arith.constant 0 : i32
    return %arg2, %arg1 : i32, i32
  }
  func.func @transform_2(%arg0: i32, %arg1: i32, %arg2: i32) -> (i32, i32) {
    %c0_i32 = arith.constant 0 : i32
    %c0_i32_0 = arith.constant 0 : i32
    return %c0_i32, %arg1 : i32, i32
  }
  func.func @transform_3(%arg0: i32, %arg1: i32, %arg2: i32) -> (i32, i32) {
    %c0_i32 = arith.constant 0 : i32
    return %arg0, %arg1 : i32, i32
  }
}

</mosaic_0001>

<llo_original>
// kernel: masked_linear.1
$region0: #{masked_linear.1}
  #allocation0 [shape = 'u32[]', space=smem, size = 0x4, offset = 0x4, fixed_abs, tag = 'smem constant byte address 0x4 - core index']
  #allocation1 [shape = 'u32[72,128]{1,0:T(1,128)}', space=vmem, size = 0x9000, scoped, tag = 'internal scratch']
  #allocation2 [shape = 'f32[16,64]{1,0:T(8,128)}', space=vmem, size = 0x2000, scoped, tag = 'scratch operand']
  %s0 = inlined_call_operand.vmem [shape: f32[16,32], index: 0, kind: input, shape index: {}]
  %s1 = inlined_call_operand.vmem [shape: f32[32,64], index: 1, kind: input, shape index: {}]
  %s2 = inlined_call_operand.vmem [shape: f32[1,64], index: 2, kind: input, shape index: {}]
  %s3 = inlined_call_operand.hbm [shape: f32[16,64], index: 3, kind: output, shape index: {}]
  %s4 = sld [smem:[#allocation0]]
  $region30: #{masked_linear.1} parent=0
    _
  %s6 = ssub.s32 1, %s4
  %s7 = scalar_select 0, %s6, %s4
  $region1: #{masked_linear.1} parent=0
    #allocation3 [shape = 'u8[8192]{0}', space=vmem, size = 0x2000, scoped, tag = 'output window, operand 0, single buffered']
    #allocation4 [shape = 's32[1]{0}', space=sflag, size = 0x4, scoped, tag = 'scoped memory for masked_linear.1']
    %8 = vsyncpa [#allocation4], 0
    // Predicated region
    $region2: #{masked_linear.1} parent=1 // pred_check
      _
    $region3: #{masked_linear.1} parent=1 // pred_check_branch
      %10 = sbr.rel (0) target = $region5
    $region4: #{masked_linear.1} parent=1 // pred_region
      _
    $region5: #{masked_linear.1} parent=1 // pred_fallthru
      _
    // Predicated region
    $region6: #{masked_linear.1} parent=1 // pred_check
      _
    $region7: #{masked_linear.1} parent=1 // pred_check_branch
      %12 = sbr.rel (0) target = $region9
    $region8: #{masked_linear.1} parent=1 // pred_region
      _
    $region9: #{masked_linear.1} parent=1 // pred_fallthru
      _
    // Predicated region
    $region10: #{masked_linear.1} parent=1 // pred_check
      _
    $region11: #{masked_linear.1} parent=1 // pred_check_branch
      %14 = sbr.rel (0) target = $region13
    $region12: #{masked_linear.1} parent=1 // pred_region
      _
    $region13: #{masked_linear.1} parent=1 // pred_fallthru
      _
    %p15 = scmp.eq.s32.totalorder 0, 0
    // Predicated region
    $region14: #{masked_linear.1} parent=1 // pred_check
      %p16 = pneg %p15
    $region15: #{masked_linear.1} parent=1 // pred_check_branch
      %18 = sbr.rel (%p16) target = $region17
    $region16: #{masked_linear.1} parent=1 // pred_region
      %vm19 = vcmask 523264
      %20 = vst.msk [vmem:[#allocation2] sm:$0xff] %vm19, 0.0
      %21 = vst.msk [vmem:[#allocation2 + $0x8] sm:$0xff] %vm19, 0.0
    $region17: #{masked_linear.1} parent=1 // pred_fallthru
      _
    %v22 = vld [vmem:[#allocation2] sm:$0xff]
    %v23 = vld [vmem:[#allocation2 + $0x8] sm:$0xff]
    %v24 = vld [vmem:[%s0] sm:$0xff]
    %v25 = vld [vmem:[%s0 + $0x8] sm:$0xff]
    %v26 = vld [vmem:[%s1] sm:$0xff]
    %v27 = vld [vmem:[%s1 + $0x8] sm:$0xff]
    %v28 = vld [vmem:[%s1 + $0x10] sm:$0xff]
    %v29 = vld [vmem:[%s1 + $0x18] sm:$0xff]
    %vm30 = vcmask 261120
    %v32 = vsel %vm30, %v24, 0
    %v35 = vsel %vm30, %v25, 0
    %37 = vmatpush.msra.mxu0 0.0
    %38 = vmatpush.msra.mxu0 0.0
    %39 = vmatpush.msra.mxu0 0.0
    %40 = vmatpush.msra.mxu0 0.0
    %41 = vmatpush.msra.mxu0 0.0
    %42 = vmatpush.msra.mxu0 0.0
    %43 = vmatpush.msra.mxu0 0.0
    %44 = vmatpush.msra.mxu0 0.0
    %45 = vmatpush.msra.mxu0 0.0
    %46 = vmatpush.msra.mxu0 0.0
    %47 = vmatpush.msra.mxu0 0.0
    %48 = vmatpush.msra.mxu0 0.0
    %49 = vmatpush.msra.mxu0 %v29
    %50 = vmatpush.msra.mxu0 %v28
    %51 = vmatpush.msra.mxu0 %v27
    %52 = vmatpush.msra.mxu0 %v26
    %53 = vmatmul.f32.gmra.mxu0 %v32
    %v54 = vpop.f32.mrf.mxu0
    %v55 = vadd.f32 0.0, %v54
    %56 = vmatmul.f32.gmra.mxu0 %v35
    %v57 = vpop.f32.mrf.mxu0
    %v58 = vadd.f32 0.0, %v57
    %59 = vdwg.mxu0
    %v60 = vadd.f32 %v22, %v55
    %v61 = vadd.f32 %v23, %v58
    %vm62 = vcmask 523264
    %63 = vst.msk [vmem:[#allocation2] sm:$0xff] %vm62, %v60
    %64 = vst.msk [vmem:[#allocation2 + $0x8] sm:$0xff] %vm62, %v61
    // Predicated region
    $region18: #{masked_linear.1} parent=1 // pred_check
      %p65 = pneg %p15
    $region19: #{masked_linear.1} parent=1 // pred_check_branch
      %67 = sbr.rel (%p65) target = $region21
    $region20: #{masked_linear.1} parent=1 // pred_region
      %v68 = vld [vmem:[#allocation2] sm:$0xff]
      %v69 = vld [vmem:[#allocation2 + $0x8] sm:$0xff]
      %v70 = vld [vmem:[%s2] sm:$0x1]
      %v72 = vperm.slane %v70, 0
      %v74 = vadd.f32 %v68, %v72
      %v75 = vadd.f32 %v69, %v72
      %76 = vst.msk [vmem:[#allocation3] sm:$0xff] %vm62, %v74
      %77 = vst.msk [vmem:[#allocation3 + $0x8] sm:$0xff] %vm62, %v75
    $region21: #{masked_linear.1} parent=1 // pred_fallthru
      _
    // Predicated region
    $region22: #{masked_linear.1} parent=1 // pred_check
      _
    $region23: #{masked_linear.1} parent=1 // pred_check_branch
      %79 = sbr.rel (0) target = $region25
    $region24: #{masked_linear.1} parent=1 // pred_region
      %81 = vsyncadd [#allocation4], 0
      %s82 = sshll.u32 [#allocation3], 4
      %s83 = int_to_ptr.vmem [resolvable:$true] %s82
      %s84 = sshll.u32 %s3, 4
      %s85 = int_to_ptr.hbm [resolvable:$true] %s84
      %90 = dma.vmem_to_hbm [thread:$0]  %s83, 256, %s85, [#allocation4], 128, 128, 8
    $region25: #{masked_linear.1} parent=1 // pred_fallthru
      _
    // Predicated region
    $region26: #{masked_linear.1} parent=1 // pred_check
      _
    $region27: #{masked_linear.1} parent=1 // pred_check_branch
      %92 = sbr.rel (0) target = $region29
    $region28: #{masked_linear.1} parent=1 // pred_region
      %94 = dma.done [#allocation4], 256
    $region29: #{masked_linear.1} parent=1 // pred_fallthru
      _
    %95 = vsyncpa [#allocation4], 1

</llo_original>
